<compile_context>
chip_gen: v5e
topology: v5e:2x2
jax: 0.10.0
libtpu: 0.0.40
codegen_flags: <defaults>
</compile_context>

<pallas_src>
import jax
import jax.numpy as jnp
from jax.experimental import pallas as pl
from jax.experimental.pallas import tpu as pltpu


def _make_generator_kernel(batch_real: int, batch_padded: int):
    """Fused Linear (no bias) + BatchNorm1d (batch stats) + ReLU, one F-tile."""
    inv_b = 1.0 / float(batch_real)
    n_pad_rows = batch_padded - batch_real

    def kernel(x_ref, w_ref, p_ref, o_ref):
        # x_ref: (B_pad, nz)  resident across all F tiles (zero-padded rows)
        # w_ref: (nz, TF)     weight tile (transposed PyTorch weight)
        # p_ref: (2, TF)      row 0 = gamma, row 1 = beta
        # o_ref: (B_pad, TF)
        x = x_ref[...]
        w = w_ref[...]

        # Linear WITHOUT bias: train-mode BatchNorm subtracts the per-feature
        # batch mean, so an additive per-feature bias cancels exactly.
        y = jnp.dot(x, w, preferred_element_type=jnp.float32)

        # Batch mean over the real rows.  Padded z rows are zero and there is
        # no bias, so padded rows of y are exactly zero and add nothing here.
        mean = jnp.sum(y, axis=0, keepdims=True) * inv_b

        # Two-pass (centered) variance: padded rows each contribute
        # (0 - mean)^2 = mean^2; remove that statically-known excess.
        d = y - mean
        ss = jnp.sum(d * d, axis=0, keepdims=True)
        if n_pad_rows:
            ss = ss - float(n_pad_rows) * (mean * mean)
        var = jnp.maximum(ss * inv_b, 0.0)          # biased variance (train mode)
        inv_std = jax.lax.rsqrt(var + 1e-5)

        p = p_ref[...]
        scale = p[0:1, :] * inv_std                 # gamma * inv_std
        bn = d * scale + p[1:2, :]                  # (y - mean)*scale + beta
        o_ref[...] = jnp.maximum(bn, 0.0).astype(o_ref.dtype)

    return kernel


def _pick_tile_f(F, B_pad, nz, in_bytes, out_bytes,
                 budget_bytes=8 * 1024 * 1024):
    """Pick the feature tile width TF (multiple of 128).

    Largest TF that (a) leaves >= 2 grid steps when F >= 256 (v7x has two
    TensorCores) and (b) keeps the double-buffered VMEM footprint under
    `budget_bytes` (safely below the 16 MiB v5e scoped-VMEM default).
    Prefers a divisor of F (no padded tail) when a reasonably large one exists.
    """
    cap = F // 2 if F >= 256 else F
    cap = max(128, (cap // 128) * 128)

    # Footprint model (every stream is double-buffered by the pipeline; the
    # (2, TF) param tile pads sublanes to 8):
    fixed = 2 * B_pad * nz * in_bytes                       # resident z
    per_tf = 2 * (nz * in_bytes + 8 * 4 + B_pad * out_bytes)  # w + params + out
    budget_tf = max(128, int((budget_bytes - fixed) // per_tf) // 128 * 128)

    limit = min(cap, budget_tf)
    best_div = 0
    for cand in range(128, limit + 1, 128):
        if F % cand == 0:
            best_div = cand
    if best_div >= max(128, limit // 2):
        return best_div
    return limit


def generator_forward(z, w_t, b, gamma, beta, *, ngf, mel_bins, time_frames,
                      tile_f=None, matmul_dtype=jnp.bfloat16,
                      out_dtype=jnp.float32):
    """z: (B, nz). Returns (B, ngf*8, mel_bins//8, time_frames//8).

    `b` (the Linear bias) is accepted for API parity with the PyTorch module
    but is mathematically cancelled by train-mode BatchNorm, so it is never
    read by the kernel.
    """
    del b  # cancelled by the batch-mean subtraction of BatchNorm1d
    B, nz = z.shape
    F = w_t.shape[1]
    assert F == ngf * 8 * (mel_bins // 8) * (time_frames // 8)
    assert F % 128 == 0, "feature dim must be a multiple of 128 for lane tiling"
    assert B >= 2, "training-mode BatchNorm1d requires batch size > 1"

    # Pad batch to a multiple of 8 sublanes -> unmasked full-sublane stores.
    B_pad = ((B + 7) // 8) * 8
    if B_pad != B:
        z_in = jnp.zeros((B_pad, nz), z.dtype).at[:B].set(z)
    else:
        z_in = z

    # Reduced-precision weight stream (HBM-read-bound kernel); f32 accumulate.
    w_in = w_t
    if matmul_dtype is not None:
        z_in = z_in.astype(matmul_dtype)
        w_in = w_in.astype(matmul_dtype)

    # Pack gamma/beta into one (2, F) array -> a single per-step param DMA.
    params = jnp.stack([jnp.reshape(gamma, (-1,)).astype(jnp.float32),
                        jnp.reshape(beta, (-1,)).astype(jnp.float32)], axis=0)

    in_bytes = jnp.dtype(z_in.dtype).itemsize
    out_bytes = jnp.dtype(out_dtype).itemsize
    TF = tile_f if tile_f is not None else _pick_tile_f(F, B_pad, nz,
                                                        in_bytes, out_bytes)
    assert TF % 128 == 0

    # Pad F to a multiple of TF if needed (zero weight/gamma/beta columns give
    # exactly-zero outputs in the padded tail; sliced off below).
    n_tiles = pl.cdiv(F, TF)
    F_pad = n_tiles * TF
    if F_pad != F:
        w_in = jnp.zeros((nz, F_pad), w_in.dtype).at[:, :F].set(w_in)
        params = jnp.zeros((2, F_pad), params.dtype).at[:, :F].set(params)

    kernel = _make_generator_kernel(B, B_pad)

    w_map = lambda j: (0, j)
    if TF == 128 and n_tiles >= 4:
        # Tiny tiles: deepen weight buffering to hide per-step DMA latency.
        w_spec = pl.BlockSpec((nz, TF), w_map, pipeline_mode=pl.Buffered(3))
    else:
        w_spec = pl.BlockSpec((nz, TF), w_map)

    out_flat = pl.pallas_call(
        kernel,
        out_shape=jax.ShapeDtypeStruct((B_pad, F_pad), out_dtype),
        grid_spec=pltpu.PrefetchScalarGridSpec(
            num_scalar_prefetch=0,
            grid=(n_tiles,),
            in_specs=[
                pl.BlockSpec((B_pad, nz), lambda j: (0, 0)),   # z: resident
                w_spec,                                        # weight tile
                pl.BlockSpec((2, TF), lambda j: (0, j)),       # gamma/beta
            ],
            out_specs=pl.BlockSpec((B_pad, TF), lambda j: (0, j)),
        ),
        compiler_params=pltpu.CompilerParams(
            dimension_semantics=("parallel",),
        ),
    )(z_in, w_in, params)

    # Drop batch/feature padding (no-op slices when B, F were already aligned).
    if B_pad != B or F_pad != F:
        out_flat = out_flat[:B, :F]
    return out_flat.reshape(B, ngf * 8, mel_bins // 8, time_frames // 8)


def _reference_forward(z, w_t, b, gamma, beta, *, ngf, mel_bins, time_frames,
                       matmul_dtype=None):
    """Pure-JAX reference of the PyTorch forward (Linear WITH bias + BN + ReLU)."""
    if matmul_dtype is not None:
        z = z.astype(matmul_dtype)
        w_t = w_t.astype(matmul_dtype)
    y = jnp.dot(z, w_t, preferred_element_type=jnp.float32) + jnp.reshape(b, (1, -1))
    mean = jnp.mean(y, axis=0, keepdims=True)
    var = jnp.mean((y - mean) ** 2, axis=0, keepdims=True)
    bn = ((y - mean) * jax.lax.rsqrt(var + 1e-5) * jnp.reshape(gamma, (1, -1))
          + jnp.reshape(beta, (1, -1)))
    out = jnp.maximum(bn, 0.0)
    return out.reshape(z.shape[0], ngf * 8, mel_bins // 8, time_frames // 8)


if __name__ == "__main__":
    # Small, shape-consistent config.
    nz = 32            # latent dim
    ngf = 8            # generator feature maps
    nc = 1             # channels (unused in this sub-module)
    mel_bins = 16
    time_frames = 16
    B = 4              # batch

    F = ngf * 8 * (mel_bins // 8) * (time_frames // 8)   # 8*8*2*2 = 256

    key = jax.random.PRNGKey(0)
    k_z, k_w, k_b = jax.random.split(key, 3)

    # Deterministic parameter init (synthetic, PyTorch-Linear-like scale).
    bound = 1.0 / jnp.sqrt(nz)
    w = jax.random.uniform(k_w, (F, nz), jnp.float32, -bound, bound)   # PyTorch (out, in)
    w_t = jnp.transpose(w)                                             # (nz, F)
    b = jax.random.uniform(k_b, (1, F), jnp.float32, -bound, bound)
    gamma = jnp.ones((F,), jnp.float32)   # BatchNorm1d weight
    beta = jnp.zeros((F,), jnp.float32)   # BatchNorm1d bias
    z = jax.random.normal(k_z, (B, nz), jnp.float32)

    expected_shape = (B, ngf * 8, mel_bins // 8, time_frames // 8)

    # Default path: bf16 weight stream, f32 accumulation / epilogue.
    out = generator_forward(
        z, w_t, b, gamma, beta, ngf=ngf, mel_bins=mel_bins, time_frames=time_frames
    )
    out = jax.block_until_ready(out)
    assert out.shape == expected_shape
    assert out.dtype == jnp.float32

    ref_bf16 = _reference_forward(
        z, w_t, b, gamma, beta, ngf=ngf, mel_bins=mel_bins,
        time_frames=time_frames, matmul_dtype=jnp.bfloat16
    )
    ref_bf16 = jax.block_until_ready(ref_bf16)
    err_bf16 = float(jnp.max(jnp.abs(out - ref_bf16)))
    assert err_bf16 < 2e-2, f"bf16 path mismatch vs bf16 reference: {err_bf16}"

    # Full-precision path: validates the fused Linear+BN+ReLU math, including
    # the dropped-bias identity, against the biased PyTorch reference.
    out_f32 = generator_forward(
        z, w_t, b, gamma, beta, ngf=ngf, mel_bins=mel_bins,
        time_frames=time_frames, matmul_dtype=None
    )
    out_f32 = jax.block_until_ready(out_f32)
    ref_f32 = _reference_forward(
        z, w_t, b, gamma, beta, ngf=ngf, mel_bins=mel_bins, time_frames=time_frames
    )
    ref_f32 = jax.block_until_ready(ref_f32)
    err_f32 = float(jnp.max(jnp.abs(out_f32 - ref_f32)))
    assert err_f32 < 2e-2, f"f32 path mismatch vs f32 reference: {err_f32}"

    print("KERNEL_OK")
</pallas_src>

<mosaic_0001>
module attributes {stable_mosaic.version = 11 : i64} {
  func.func @kernel(%arg0: i32, %arg1: memref<8x32xbf16, #tpu.memory_space<vmem>>, %arg2: memref<32x128xbf16, #tpu.memory_space<vmem>>, %arg3: memref<2x128xf32, #tpu.memory_space<vmem>>, %arg4: memref<8x128xf32, #tpu.memory_space<vmem>>) attributes {dimension_semantics = [#tpu.dimension_semantics<parallel>], iteration_bounds = array<i64: 2>, scalar_prefetch = 0 : i64, scratch_operands = 0 : i64, tpu.core_type = #tpu.core_type<tc>, window_params = [{pipeline_mode = #tpu.pipeline_mode<synchronous>, transform_indices = @transform_0, window_bounds = array<i64: 8, 32>}, {transform_indices = @transform_1, window_bounds = array<i64: 32, 128>}, {transform_indices = @transform_2, window_bounds = array<i64: 2, 128>}, {transform_indices = @transform_3, window_bounds = array<i64: 8, 128>}]} {
    %c0 = arith.constant 0 : index
    %c0_0 = arith.constant 0 : index
    %0 = vector.load %arg1[%c0, %c0_0] : memref<8x32xbf16, #tpu.memory_space<vmem>>, vector<8x32xbf16>
    %c0_1 = arith.constant 0 : index
    %c0_2 = arith.constant 0 : index
    %1 = vector.load %arg2[%c0_1, %c0_2] : memref<32x128xbf16, #tpu.memory_space<vmem>>, vector<32x128xbf16>
    %cst = arith.constant dense<0.000000e+00> : vector<8x128xf32>
    %2 = tpu.matmul %0, %1, %cst {dimension_numbers = #tpu.dot_dimension_numbers<[1], [0], [0], [1], [0, 0, 1, 1], [], []>} : vector<8x32xbf16>, vector<32x128xbf16>, vector<8x128xf32> -> vector<8x128xf32>
    %cst_3 = arith.constant dense<0.000000e+00> : vector<128xf32>
    %3 = vector.multi_reduction <add>, %2, %cst_3 [0] : vector<8x128xf32> to vector<128xf32>
    %4 = vector.shape_cast %3 : vector<128xf32> to vector<1x128xf32>
    %cst_4 = arith.constant 2.500000e-01 : f32
    %5 = vector.broadcast %cst_4 : f32 to vector<1x128xf32>
    %6 = arith.mulf %4, %5 : vector<1x128xf32>
    %7 = vector.broadcast %6 : vector<1x128xf32> to vector<8x128xf32>
    %8 = arith.subf %2, %7 : vector<8x128xf32>
    %9 = arith.mulf %8, %8 : vector<8x128xf32>
    %cst_5 = arith.constant dense<0.000000e+00> : vector<128xf32>
    %10 = vector.multi_reduction <add>, %9, %cst_5 [0] : vector<8x128xf32> to vector<128xf32>
    %11 = vector.shape_cast %10 : vector<128xf32> to vector<1x128xf32>
    %12 = arith.mulf %6, %6 : vector<1x128xf32>
    %cst_6 = arith.constant 4.000000e+00 : f32
    %13 = vector.broadcast %cst_6 : f32 to vector<1x128xf32>
    %14 = arith.mulf %13, %12 : vector<1x128xf32>
    %15 = arith.subf %11, %14 : vector<1x128xf32>
    %cst_7 = arith.constant 2.500000e-01 : f32
    %16 = vector.broadcast %cst_7 : f32 to vector<1x128xf32>
    %17 = arith.mulf %15, %16 : vector<1x128xf32>
    %cst_8 = arith.constant 0.000000e+00 : f32
    %18 = vector.broadcast %cst_8 : f32 to vector<1x128xf32>
    %19 = arith.maximumf %17, %18 : vector<1x128xf32>
    %cst_9 = arith.constant 9.99999974E-6 : f32
    %20 = vector.broadcast %cst_9 : f32 to vector<1x128xf32>
    %21 = arith.addf %19, %20 : vector<1x128xf32>
    %22 = math.rsqrt %21 : vector<1x128xf32>
    %c0_10 = arith.constant 0 : index
    %c0_11 = arith.constant 0 : index
    %23 = vector.load %arg3[%c0_10, %c0_11] : memref<2x128xf32, #tpu.memory_space<vmem>>, vector<2x128xf32>
    %24 = vector.extract_strided_slice %23 {offsets = [0, 0], sizes = [1, 128], strides = [1, 1]} : vector<2x128xf32> to vector<1x128xf32>
    %25 = arith.mulf %24, %22 : vector<1x128xf32>
    %26 = vector.broadcast %25 : vector<1x128xf32> to vector<8x128xf32>
    %27 = arith.mulf %8, %26 : vector<8x128xf32>
    %28 = vector.extract_strided_slice %23 {offsets = [1, 0], sizes = [1, 128], strides = [1, 1]} : vector<2x128xf32> to vector<1x128xf32>
    %29 = vector.broadcast %28 : vector<1x128xf32> to vector<8x128xf32>
    %30 = arith.addf %27, %29 : vector<8x128xf32>
    %cst_12 = arith.constant 0.000000e+00 : f32
    %31 = vector.broadcast %cst_12 : f32 to vector<8x128xf32>
    %32 = arith.maximumf %30, %31 : vector<8x128xf32>
    %c0_13 = arith.constant 0 : index
    %c0_14 = arith.constant 0 : index
    %33 = vector.load %arg4[%c0_13, %c0_14] : memref<8x128xf32, #tpu.memory_space<vmem>>, vector<8x128xf32>
    tpu.vector_store %arg4[%c0_13, %c0_14], %32 {strides = array<i32>} : memref<8x128xf32, #tpu.memory_space<vmem>>, vector<8x128xf32>,
    return
  }
  func.func @transform_0(%arg0: i32) -> (i32, i32) {
    %c0_i32 = arith.constant 0 : i32
    %c0_i32_0 = arith.constant 0 : i32
    %c0_i32_1 = arith.constant 0 : i32
    return %c0_i32, %c0_i32_0 : i32, i32
  }
  func.func @transform_1(%arg0: i32) -> (i32, i32) {
    %c0_i32 = arith.constant 0 : i32
    %c0_i32_0 = arith.constant 0 : i32
    return %c0_i32, %arg0 : i32, i32
  }
  func.func @transform_2(%arg0: i32) -> (i32, i32) {
    %c0_i32 = arith.constant 0 : i32
    %c0_i32_0 = arith.constant 0 : i32
    return %c0_i32, %arg0 : i32, i32
  }
  func.func @transform_3(%arg0: i32) -> (i32, i32) {
    %c0_i32 = arith.constant 0 : i32
    %c0_i32_0 = arith.constant 0 : i32
    return %c0_i32, %arg0 : i32, i32
  }
}

</mosaic_0001>

<llo_original>
// kernel: tpu_custom_call.1
$region0: #{tpu_custom_call.1}
  #allocation0 [shape = 'u32[]', space=smem, size = 0x4, offset = 0x4, fixed_abs, tag = 'smem constant byte address 0x4 - core index']
  #allocation1 [shape = 'u32[72,128]{1,0:T(1,128)}', space=vmem, size = 0x9000, scoped, tag = 'internal scratch']
  %s0 = inlined_call_operand.hbm [shape: bf16[8,32], index: 0, kind: input, shape index: {}]
  %s1 = inlined_call_operand.hbm [shape: bf16[32,256], index: 1, kind: input, shape index: {}]
  %s2 = inlined_call_operand.hbm [shape: f32[2,256], index: 2, kind: input, shape index: {}]
  %s3 = inlined_call_operand.hbm [shape: f32[8,256], index: 3, kind: output, shape index: {}]
  %s4 = sld [smem:[#allocation0]]
  $region57: #{tpu_custom_call.1} parent=0
    _
  %s6 = ssub.s32 1, %s4
  %s7 = scalar_select 0, %s6, %s4
  $region1: #{tpu_custom_call.1} parent=0
    #allocation2 [shape = 'u8[2048]{0}', space=vmem, size = 0x800, scoped, tag = 'input window, operand 0, single buffered']
    #allocation3 [shape = 's32[2]{0}', space=sflag, size = 0x8, scoped, tag = 'scoped memory for tpu_custom_call.1']
    #allocation4 [shape = 's32[2]{0}', space=sflag, size = 0x8, scoped, tag = 'scoped memory for tpu_custom_call.1']
    #allocation5 [shape = 'u8[16384]{0}', space=vmem, size = 0x4000, scoped, tag = 'input window, operand 1']
    #allocation6 [shape = 's32[2]{0}', space=sflag, size = 0x8, scoped, tag = 'scoped memory for tpu_custom_call.1']
    #allocation7 [shape = 'u8[2048]{0}', space=vmem, size = 0x800, scoped, tag = 'input window, operand 2']
    #allocation8 [shape = 'u8[8192]{0}', space=vmem, size = 0x2000, scoped, tag = 'output window, operand 0']
    %8 = vsyncpa [#allocation3], 0
    %9 = vsyncpa [#allocation6], 0
    %s10 = scalar_lea.sflag [#allocation6], 1
    %11 = vsyncpa %s10, 0
    %12 = vsyncpa [#allocation4], 0
    %s13 = scalar_lea.sflag [#allocation4], 1
    %14 = vsyncpa %s13, 0
    loop: start=0, step=1, limit=4
    $region2: #{tpu_custom_call.1} parent=1 // loop_pre_header
      _
    $region3: #{tpu_custom_call.1} parent=1 // loop_header
      %s16 = sphi 0, %s20
      %p17 = scmp.ge.s32.totalorder %s16, 4
      %s24 = sphi 0, %s24
      %s26 = sphi 0, %s24
      %s27 = sphi 0, %s26
      %s41 = sphi 0, %s27
      %s47 = sphi 0, %s49
      %s50 = sphi 0, %s47
      %s51 = sphi 0, %s50
      %s67 = sphi 0, %s51
      %s73 = sphi 0, %s75
      %s76 = sphi 0, %s73
      %s77 = sphi 0, %s76
      %s93 = sphi 0, %s77
      %s99 = sphi 0, %s101
      %s102 = sphi 0, %s99
      %s103 = sphi 0, %s102
      %s119 = sphi 0, %s103
    $region4: #{tpu_custom_call.1} parent=1 // loop_header_branch
      %19 = sbr.rel (%p17) target = $region8
    $region5: #{tpu_custom_call.1} parent=1 // loop_body
      %s21 = ssub.s32 %s16, 1
      %s22 = ssub.s32 %s16, 2
      %s23 = sadd.s32 %s16, 1
      %s25 = sadd.s32 %s24, 1
      %p28 = scmp.eq.s32.totalorder %s16, 1
      %p29 = scmp.ne.s32.totalorder %s24, %s26
      %p30 = scmp.eq.s32.totalorder %s16, 0
      %p31 = por %p29, %p30
      %p32 = scmp.ne.s32.totalorder %s24, %s26
      %p33 = scmp.eq.s32.totalorder %s21, 1
      %p34 = por %p32, %p33
      %p35 = scmp.ne.s32.totalorder %s26, %s27
      %p36 = scmp.eq.s32.totalorder %s21, 0
      %p37 = por %p35, %p36
      %p38 = scmp.ne.s32.totalorder %s26, %s27
      %p39 = scmp.eq.s32.totalorder %s22, 1
      %p40 = por %p38, %p39
      %p42 = scmp.ne.s32.totalorder %s27, %s41
      %p43 = scmp.eq.s32.totalorder %s22, 0
      %p44 = por %p42, %p43
      %s45 = ssub.s32 %s16, %s23
      %p46 = scmp.eq.s32.totalorder %s45, 0
      %s48 = sadd.s32 %s47, 1
      %s49 = scalar_select %p46, %s47, %s48
      %p52 = pneg %p46
      %p53 = scmp.eq.s32.totalorder %s16, 1
      %p54 = por %p52, %p53
      %p55 = scmp.ne.s32.totalorder %s47, %s50
      %p56 = scmp.eq.s32.totalorder %s16, 0
      %p57 = por %p55, %p56
      %p58 = scmp.ne.s32.totalorder %s47, %s50
      %p59 = scmp.eq.s32.totalorder %s21, 1
      %p60 = por %p58, %p59
      %p61 = scmp.ne.s32.totalorder %s50, %s51
      %p62 = scmp.eq.s32.totalorder %s21, 0
      %p63 = por %p61, %p62
      %p64 = scmp.ne.s32.totalorder %s50, %s51
      %p65 = scmp.eq.s32.totalorder %s22, 1
      %p66 = por %p64, %p65
      %p68 = scmp.ne.s32.totalorder %s51, %s67
      %p69 = scmp.eq.s32.totalorder %s22, 0
      %p70 = por %p68, %p69
      %s71 = ssub.s32 %s16, %s23
      %p72 = scmp.eq.s32.totalorder %s71, 0
      %s74 = sadd.s32 %s73, 1
      %s75 = scalar_select %p72, %s73, %s74
      %p78 = pneg %p72
      %p79 = scmp.eq.s32.totalorder %s16, 1
      %p80 = por %p78, %p79
      %p81 = scmp.ne.s32.totalorder %s73, %s76
      %p82 = scmp.eq.s32.totalorder %s16, 0
      %p83 = por %p81, %p82
      %p84 = scmp.ne.s32.totalorder %s73, %s76
      %p85 = scmp.eq.s32.totalorder %s21, 1
      %p86 = por %p84, %p85
      %p87 = scmp.ne.s32.totalorder %s76, %s77
      %p88 = scmp.eq.s32.totalorder %s21, 0
      %p89 = por %p87, %p88
      %p90 = scmp.ne.s32.totalorder %s76, %s77
      %p91 = scmp.eq.s32.totalorder %s22, 1
      %p92 = por %p90, %p91
      %p94 = scmp.ne.s32.totalorder %s77, %s93
      %p95 = scmp.eq.s32.totalorder %s22, 0
      %p96 = por %p94, %p95
      %s97 = ssub.s32 %s16, %s23
      %p98 = scmp.eq.s32.totalorder %s97, 0
      %s100 = sadd.s32 %s99, 1
      %s101 = scalar_select %p98, %s99, %s100
      %p104 = pneg %p98
      %p105 = scmp.eq.s32.totalorder %s16, 1
      %p106 = por %p104, %p105
      %p107 = scmp.ne.s32.totalorder %s99, %s102
      %p108 = scmp.eq.s32.totalorder %s16, 0
      %p109 = por %p107, %p108
      %p110 = scmp.ne.s32.totalorder %s99, %s102
      %p111 = scmp.eq.s32.totalorder %s21, 1
      %p112 = por %p110, %p111
      %p113 = scmp.ne.s32.totalorder %s102, %s103
      %p114 = scmp.eq.s32.totalorder %s21, 0
      %p115 = por %p113, %p114
      %p116 = scmp.ne.s32.totalorder %s102, %s103
      %p117 = scmp.eq.s32.totalorder %s22, 1
      %p118 = por %p116, %p117
      %p120 = scmp.ne.s32.totalorder %s103, %s119
      %p121 = scmp.eq.s32.totalorder %s22, 0
      %p122 = por %p120, %p121
      %p123 = scmp.le.s32.totalorder 1, %s16
      %p124 = scmp.lt.s32.totalorder %s16, 3
      %p125 = pnand %p123, %p124
      %p126 = pneg %p125
      // Predicated region
      $region9: #{tpu_custom_call.1} parent=5 // pred_check
        _
      $region10: #{tpu_custom_call.1} parent=5 // pred_check_branch
        %128 = sbr.rel (%p125) target = $region12
      $region11: #{tpu_custom_call.1} parent=5 // pred_region
        %s129 = ssub.s32 %s16, 1
        // Predicated region
        $region13: #{tpu_custom_call.1} parent=11 // pred_check
          %p130 = pneg %p37
        $region14: #{tpu_custom_call.1} parent=11 // pred_check_branch
          %132 = sbr.rel (%p130) target = $region16
        $region15: #{tpu_custom_call.1} parent=11 // pred_region
          %134 = vsyncadd [#allocation3], 0
          %s136 = sshll.u32 %s0, 4
          %s137 = int_to_ptr.hbm [resolvable:$true] %s136
          %s138 = sshll.u32 [#allocation2], 4
          %s139 = int_to_ptr.vmem [resolvable:$true] %s138
          %141 = dma.hbm_to_vmem [thread:$0]  %s137, 64, %s139, [#allocation3]
        $region16: #{tpu_custom_call.1} parent=11 // pred_fallthru
          _
      $region12: #{tpu_custom_call.1} parent=5 // pred_fallthru
        _
      %p142 = scmp.lt.s32.totalorder %s16, 2
      // Predicated region
      $region17: #{tpu_custom_call.1} parent=5 // pred_check
        %p143 = pneg %p142
      $region18: #{tpu_custom_call.1} parent=5 // pred_check_branch
        %145 = sbr.rel (%p143) target = $region20
      $region19: #{tpu_custom_call.1} parent=5 // pred_region
        // Predicated region
        $region21: #{tpu_custom_call.1} parent=19 // pred_check
          %p146 = pneg %p57
        $region22: #{tpu_custom_call.1} parent=19 // pred_check_branch
          %148 = sbr.rel (%p146) target = $region24
        $region23: #{tpu_custom_call.1} parent=19 // pred_region
          %s149 = sand.u32 %s16, 1
          %s150 = scalar_lea.sflag [#allocation6], %s149
          %s151 = sand.u32 %s47, 1
          %s152 = smul.addr %s151, 16
          %s153 = scalar_lea.vmem [#allocation5], %s152
          %155 = vsyncadd %s150, 0
          %s156 = smul.addr %s16, 4
          %s157 = scalar_lea.hbm %s1, %s156
          %s158 = sshll.u32 %s157, 4
          %s159 = int_to_ptr.hbm [resolvable:$true] %s158
          %s160 = sshll.u32 %s153, 4
          %s161 = int_to_ptr.vmem [resolvable:$true] %s160
          %166 = dma.hbm_to_vmem [thread:$0]  %s159, 256, %s161, %s150, 128, 64, 4
        $region24: #{tpu_custom_call.1} parent=19 // pred_fallthru
          _
        // Predicated region
        $region25: #{tpu_custom_call.1} parent=19 // pred_check
          %p167 = pneg %p83
        $region26: #{tpu_custom_call.1} parent=19 // pred_check_branch
          %169 = sbr.rel (%p167) target = $region28
        $region27: #{tpu_custom_call.1} parent=19 // pred_region
          %s170 = sand.u32 %s16, 1
          %s171 = scalar_lea.sflag [#allocation6], %s170
          %s172 = sand.u32 %s73, 1
          %s173 = smul.addr %s172, 2
          %s174 = scalar_lea.vmem [#allocation7], %s173
          %176 = vsyncadd %s171, 0
          %s177 = smul.addr %s16, 2
          %s178 = scalar_lea.hbm %s2, %s177
          %s180 = sshll.u32 %s178, 4
          %s181 = int_to_ptr.hbm [resolvable:$true] %s180
          %s182 = sshll.u32 %s174, 4
          %s183 = int_to_ptr.vmem [resolvable:$true] %s182
          %185 = dma.hbm_to_vmem [thread:$0]  %s181, 32, %s183, %s171
        $region28: #{tpu_custom_call.1} parent=19 // pred_fallthru
          _
      $region20: #{tpu_custom_call.1} parent=5 // pred_fallthru
        _
      %p186 = scmp.le.s32.totalorder 1, %s16
      %p187 = scmp.lt.s32.totalorder %s16, 3
      %p188 = pnand %p186, %p187
      %p189 = pneg %p188
      // Predicated region
      $region29: #{tpu_custom_call.1} parent=5 // pred_check
        _
      $region30: #{tpu_custom_call.1} parent=5 // pred_check_branch
        %191 = sbr.rel (%p188) target = $region32
      $region31: #{tpu_custom_call.1} parent=5 // pred_region
        %s192 = ssub.s32 %s16, 1
        // Predicated region
        $region33: #{tpu_custom_call.1} parent=31 // pred_check
          %p193 = pneg %p37
        $region34: #{tpu_custom_call.1} parent=31 // pred_check_branch
          %195 = sbr.rel (%p193) target = $region36
        $region35: #{tpu_custom_call.1} parent=31 // pred_region
          %197 = dma.done [#allocation3], 64
        $region36: #{tpu_custom_call.1} parent=31 // pred_fallthru
          _
        %s198 = sand.u32 %s21, 1
        %s199 = scalar_lea.sflag [#allocation6], %s198
        %s200 = sand.u32 %s50, 1
        %s201 = smul.addr %s200, 16
        %s202 = scalar_lea.vmem [#allocation5], %s201
        // Predicated region
        $region37: #{tpu_custom_call.1} parent=31 // pred_check
          %p203 = pneg %p63
        $region38: #{tpu_custom_call.1} parent=31 // pred_check_branch
          %205 = sbr.rel (%p203) target = $region40
        $region39: #{tpu_custom_call.1} parent=31 // pred_region
          %207 = dma.done %s199, 256
        $region40: #{tpu_custom_call.1} parent=31 // pred_fallthru
          _
        %s208 = sand.u32 %s21, 1
        %s209 = scalar_lea.sflag [#allocation6], %s208
        %s210 = sand.u32 %s76, 1
        %s211 = smul.addr %s210, 2
        %s212 = scalar_lea.vmem [#allocation7], %s211
        // Predicated region
        $region41: #{tpu_custom_call.1} parent=31 // pred_check
          %p213 = pneg %p89
        $region42: #{tpu_custom_call.1} parent=31 // pred_check_branch
          %215 = sbr.rel (%p213) target = $region44
        $region43: #{tpu_custom_call.1} parent=31 // pred_region
          %217 = dma.done %s209, 32
        $region44: #{tpu_custom_call.1} parent=31 // pred_fallthru
          _
        %p218 = pneg %p37
        %p219 = pneg %p34
        %s220 = sand.u32 %s21, 1
        %s221 = scalar_lea.sflag [#allocation6], %s220
        %s222 = sand.u32 %s50, 1
        %s223 = smul.addr %s222, 16
        %s224 = scalar_lea.vmem [#allocation5], %s223
        %p225 = pneg %p63
        %p226 = pneg %p60
        %s227 = sand.u32 %s21, 1
        %s228 = scalar_lea.sflag [#allocation6], %s227
        %s229 = sand.u32 %s76, 1
        %s230 = smul.addr %s229, 2
        %s231 = scalar_lea.vmem [#allocation7], %s230
        %p232 = pneg %p89
        %p233 = pneg %p86
        %p234 = pneg %p115
        %p235 = pneg %p112
        %s236 = sand.u32 %s102, 1
        %s237 = scalar_lea.sflag [#allocation4], %s236
        %s238 = sand.u32 %s102, 1
        %s239 = smul.addr %s238, 8
        %s240 = scalar_lea.vmem [#allocation8], %s239
        %v242 = vld [vmem:[#allocation2] sm:$0xf]
        %v243 = vld [vmem:[%s202] sm:$0xf]
        %v244 = vld [vmem:[%s202 + $0x4] sm:$0xf]
        %v245 = vld [vmem:[%s202 + $0x8] sm:$0xf]
        %v246 = vld [vmem:[%s202 + $0xc] sm:$0xf]
        %v251 = vunpack.c.l.b16 %v243
        %v252 = vunpack.c.l.b16 %v244
        %v253 = vunpack.c.l.b16 %v245
        %v254 = vunpack.c.l.b16 %v246
        %v255 = vpack.c.b16 %v252, %v251
        %v256 = vpack.c.b16 %v254, %v253
        %vm259 = vcmask 261120
        %v261 = vsel %vm259, %v242, 0
        %263 = vmatpush.bf16.msra.mxu0 0
        %264 = vmatpush.bf16.msra.mxu0 0
        %265 = vmatpush.bf16.msra.mxu0 0
        %266 = vmatpush.bf16.msra.mxu0 0
        %267 = vmatpush.bf16.msra.mxu0 0
        %268 = vmatpush.bf16.msra.mxu0 0
        %269 = vmatpush.bf16.msra.mxu0 %v256
        %270 = vmatpush.bf16.msra.mxu0 %v255
        %271 = vmatmul.bf16.gmra.mxu0 %v261
        %v272 = vpop.f32.mrf.mxu0
        %v273 = vadd.f32 0.0, %v272
        %v274 = vpop.f32.mrf.mxu0
        %275 = vdwg.mxu0
        %v276 = vrot.slane %v273, 4
        %v277 = vadd.f32 %v273, %v276
        %v278 = vrot.slane %v277, 2
        %v279 = vadd.f32 %v277, %v278
        %v280 = vrot.slane %v279, 1
        %v281 = vadd.f32 %v279, %v280
        %v282 = vmul.f32 %v281, 0.25
        %v283 = vsub.f32 %v273, %v282
        %v284 = vmul.f32 %v283, %v283
        %v285 = vrot.slane %v284, 4
        %v286 = vadd.f32 %v284, %v285
        %v287 = vrot.slane %v286, 2
        %v288 = vadd.f32 %v286, %v287
        %v289 = vrot.slane %v288, 1
        %v290 = vadd.f32 %v288, %v289
        %v291 = vmul.f32 %v282, %v282
        %v292 = vmul.f32 %v291, 4.0
        %v293 = vsub.f32 %v290, %v292
        %v294 = vmul.f32 %v293, 0.25
        %v295 = vmax.f32 %v294, 0.0
        %v296 = vadd.f32 %v295, 1e-05
        %v297 = vrsqrt.pop %v296
        %v298 = vmul.f32 %v297, %v296
        %v299 = vmul.f32 %v298, %v297
        %v300 = vmul.f32 0.5, %v299
        %v301 = vsub.f32 1.5, %v300
        %v302 = vmul.f32 %v297, %v301
        %vm303 = vweird.f32 %v296
        %vm304 = vweird.f32 %v297
        %vm305 = vmor %vm303, %vm304
        %v306 = vsel %vm305, %v297, %v302
        %v307 = vld [vmem:[%s212] sm:$0x3]
        %v308 = vmul.f32 %v307, %v306
        %v309 = vperm.slane %v308, 0
        %v310 = vmul.f32 %v283, %v309
        %v311 = vperm.slane %v307, 1
        %v312 = vadd.f32 %v310, %v311
        %v313 = vmax.f32 %v312, 0.0
        %314 = vst [vmem:[%s240] sm:$0xff] %v313
        %s315 = sand.u32 %s102, 1
        %s316 = scalar_lea.sflag [#allocation4], %s315
        %s317 = sand.u32 %s102, 1
        %s318 = smul.addr %s317, 8
        %s319 = scalar_lea.vmem [#allocation8], %s318
        // Predicated region
        $region45: #{tpu_custom_call.1} parent=31 // pred_check
          %p320 = pneg %p112
        $region46: #{tpu_custom_call.1} parent=31 // pred_check_branch
          %322 = sbr.rel (%p320) target = $region48
        $region47: #{tpu_custom_call.1} parent=31 // pred_region
          %324 = vsyncadd %s316, 0
          %s325 = smul.addr %s21, 8
          %s326 = scalar_lea.hbm %s3, %s325
          %s328 = sshll.u32 %s319, 4
          %s329 = int_to_ptr.vmem [resolvable:$true] %s328
          %s330 = sshll.u32 %s326, 4
          %s331 = int_to_ptr.hbm [resolvable:$true] %s330
          %333 = dma.vmem_to_hbm [thread:$0]  %s329, 128, %s331, %s316
        $region48: #{tpu_custom_call.1} parent=31 // pred_fallthru
          _
      $region32: #{tpu_custom_call.1} parent=5 // pred_fallthru
        _
      %p334 = scmp.le.s32.totalorder 2, %s16
      // Predicated region
      $region49: #{tpu_custom_call.1} parent=5 // pred_check
        %p335 = pneg %p334
      $region50: #{tpu_custom_call.1} parent=5 // pred_check_branch
        %337 = sbr.rel (%p335) target = $region52
      $region51: #{tpu_custom_call.1} parent=5 // pred_region
        %s338 = ssub.s32 %s16, 2
        // Predicated region
        $region53: #{tpu_custom_call.1} parent=51 // pred_check
          %p339 = pneg %p118
        $region54: #{tpu_custom_call.1} parent=51 // pred_check_branch
          %341 = sbr.rel (%p339) target = $region56
        $region55: #{tpu_custom_call.1} parent=51 // pred_region
          %s342 = sand.u32 %s103, 1
          %s343 = scalar_lea.sflag [#allocation4], %s342
          %s344 = sand.u32 %s103, 1
          %s345 = smul.addr %s344, 8
          %s346 = scalar_lea.vmem [#allocation8], %s345
          %348 = dma.done %s343, 128
        $region56: #{tpu_custom_call.1} parent=51 // pred_fallthru
          _
      $region52: #{tpu_custom_call.1} parent=5 // pred_fallthru
        _
    $region6: #{tpu_custom_call.1} parent=1 // loop_footer
      %s20 = sadd.s32 1, %s16
    $region7: #{tpu_custom_call.1} parent=1 // loop_footer_branch
      %15 = sbr.rel target = $region3
    $region8: #{tpu_custom_call.1} parent=1 // loop_exit
      _
    %349 = vsyncpa [#allocation3], 1
    %s350 = scalar_lea.sflag [#allocation3], 1
    %351 = vsyncpa %s350, 1
    %352 = vsyncpa [#allocation6], 1
    %s353 = scalar_lea.sflag [#allocation6], 1
    %354 = vsyncpa %s353, 1
    %355 = vsyncpa [#allocation4], 1
    %s356 = scalar_lea.sflag [#allocation4], 1
    %357 = vsyncpa %s356, 1

</llo_original>
